<compile_context>
chip_gen: v7x
topology: tpu7x:2x2x1
jax: 0.10.0
libtpu: 0.0.40
codegen_flags: <defaults>
</compile_context>

<pallas_src>
import functools

import jax
import jax.numpy as jnp
from jax.experimental import pallas as pl
from jax.experimental.pallas import tpu as pltpu


def _round_up(x, m):
    return ((x + m - 1) // m) * m


def _default_max_block_rows():
    """Per-generation row-tile cap (each row is 128 lanes)."""
    try:
        kind = jax.devices()[0].device_kind.lower()
    except Exception:
        return 1024
    if "v6" in kind or "trillium" in kind:
        return 2048          # 128 MiB VMEM: amortize per-step overhead more
    return 1024              # v5e (16 MiB scoped default) / v7x (64 MiB) / other


def _choose_block_rows(rows, sublane, max_block_rows):
    """Pick (block_rows, padded_rows).

    block_rows is a multiple of the dtype's sublane packing (or the full
    extent for tiny problems); padded_rows is a whole number of blocks; for
    problems big enough the grid is forced to >= 2 steps so the 1-D
    "parallel" grid can shard across both v7x TensorCores.
    """
    max_block_rows = max(sublane, (max_block_rows // sublane) * sublane)
    if rows <= 2 * sublane:
        return rows, rows                                 # one full-extent block
    cap = min(max_block_rows, _round_up(-(-rows // 2), sublane))
    best_br, best_pad = sublane, _round_up(rows, sublane)
    for br in range(sublane, cap + 1, sublane):
        padded = _round_up(rows, br)
        if padded <= best_pad:                            # prefer larger br on ties
            best_br, best_pad = br, padded
    return best_br, best_pad


# --------------------------------------------------------------------------
# degree == 1 kernel:  v2c[0] = chn;  posterior = (v2c[0] == c2v[0])
# --------------------------------------------------------------------------
def _deg1_kernel(c2v_ref, chn_ref, v2c_ref, post_ref):
    chn = chn_ref[...]                                   # (br, 128) binary
    v2c_ref[0] = chn.astype(v2c_ref.dtype)               # single row store
    post_ref[...] = (chn == c2v_ref[0]).astype(post_ref.dtype)


# --------------------------------------------------------------------------
# degree == 2 kernel (stochastic-computing counter update)
#   thr_ref: (2,) f32 in SMEM -- one threshold per degree row (constant over
#   all N-tiles, matching torch.randint(0, 2**depth, (degree, 1)) broadcast).
# --------------------------------------------------------------------------
def _deg2_kernel(thr_ref, c2v_ref, chn_ref, acc_ref,
                 v2c_ref, post_ref, acc_out_ref, *, acc_max):
    chn = chn_ref[...]                                   # (br, 128) binary {0,1}
    c2v0 = c2v_ref[0]
    c2v1 = c2v_ref[1]
    acc0 = acc_ref[0]
    acc1 = acc_ref[1]
    thr0 = thr_ref[0]                                    # SMEM scalar splat
    thr1 = thr_ref[1]

    # 1 - (chn XOR c2v[other]) on binary values == (chn == c2v[other])
    eq0 = chn == c2v1
    eq1 = chn == c2v0

    regen0 = (acc0 > thr0).astype(chn.dtype)
    regen1 = (acc1 > thr1).astype(chn.dtype)

    v2c0 = jnp.where(eq0, chn, regen0)
    v2c1 = jnp.where(eq1, chn, regen1)
    v2c_ref[0] = v2c0
    v2c_ref[1] = v2c1
    post_ref[...] = (v2c0 == c2v0).astype(post_ref.dtype)

    # acc <- clamp(acc + eq * (2*chn - 1), 0, acc_max); exact in bf16 (depth<=8)
    delta = chn * 2.0 - 1.0
    acc_out_ref[0] = jnp.clip(jnp.where(eq0, acc0 + delta, acc0), 0.0, acc_max)
    acc_out_ref[1] = jnp.clip(jnp.where(eq1, acc1 + delta, acc1), 0.0, acc_max)


# --------------------------------------------------------------------------
# Wrapper mirroring the torch module (functional state for `acc`)
# --------------------------------------------------------------------------
class VariableNodeCNT:
    def __init__(self, degree=1, depth=7, LLR=None, n=1024,
                 max_block_rows=None, dtype=None):
        assert degree in (1, 2), \
            "degree 3/4 require the external ShiftReg module (not provided)"
        assert n % 128 == 0, "n must be a multiple of 128 (lane-dense layout)"
        self.degree = degree
        self.depth = depth
        self.acc_max = 2 ** depth - 1
        self.acc_max_1 = 2 ** depth
        self.n = n
        self.rows = n // 128

        if dtype is None:
            # bf16 is exact for {0,1} and for integers up to 256 (depth <= 8).
            dtype = jnp.bfloat16 if self.acc_max_1 <= 256 else jnp.float32
        self.dtype = jnp.dtype(dtype)
        itemsize = self.dtype.itemsize
        sublane = {4: 8, 2: 16, 1: 32}[itemsize]

        if max_block_rows is None:
            max_block_rows = _default_max_block_rows()
        self.block_rows, self.padded_rows = _choose_block_rows(
            self.rows, sublane, max_block_rows)
        pad_rows = self.padded_rows - self.rows

        if LLR is None:
            LLR = jnp.zeros((1,), jnp.float32)
        llr = jnp.broadcast_to(jnp.asarray(LLR, jnp.float32).reshape(-1), (n,))
        llr = jnp.pad(llr.reshape(self.rows, 128), ((0, pad_rows), (0, 0)))
        # torch broadcasts acc up to (degree, N) on the first degree-2 update;
        # store it pre-broadcast, padded, in the sublane/lane-dense layout.
        self._acc = jnp.broadcast_to(
            llr[None], (degree, self.padded_rows, 128)).astype(self.dtype)

        d, rows, prows = degree, self.rows, self.padded_rows
        br, n_, dt = self.block_rows, self.n, self.dtype
        acc_max_1 = self.acc_max_1
        grid = (prows // br,)
        edge_spec = pl.BlockSpec((d, br, 128), lambda i: (0, i, 0))
        vec_spec = pl.BlockSpec((br, 128), lambda i: (i, 0))
        smem_spec = pl.BlockSpec(memory_space=pltpu.MemorySpace.SMEM)

        # VMEM budget: (blocks per grid step) x double-buffering. Only raise
        # the scoped-VMEM limit when actually needed (safe on v5e/v7x).
        blocks_per_step = 4 if degree == 1 else 10
        working = blocks_per_step * br * 128 * itemsize * 2
        vmem_limit = None
        if working > 12 * 1024 * 1024:
            vmem_limit = min(int(working * 1.5) + (4 << 20), 64 << 20)
        cparams = pltpu.CompilerParams(
            dimension_semantics=("parallel",), vmem_limit_bytes=vmem_limit)

        if degree == 1:
            call = pl.pallas_call(
                _deg1_kernel,
                grid=grid,
                in_specs=[edge_spec, vec_spec],
                out_specs=(edge_spec, vec_spec),
                out_shape=(jax.ShapeDtypeStruct((d, prows, 128), dt),
                           jax.ShapeDtypeStruct((prows, 128), dt)),
                compiler_params=cparams,
            )

            def fwd(c2v, chn):
                c2v3 = jnp.asarray(c2v, dt).reshape(d, rows, 128)
                chn2 = jnp.asarray(chn, dt).reshape(rows, 128)
                if pad_rows:
                    c2v3 = jnp.pad(c2v3, ((0, 0), (0, pad_rows), (0, 0)))
                    chn2 = jnp.pad(chn2, ((0, pad_rows), (0, 0)))
                v2c3, post2 = call(c2v3, chn2)
                return (v2c3[:, :rows].reshape(d, n_),
                        post2[:rows].reshape(n_))

            self._fwd = jax.jit(fwd)
        else:
            kernel = functools.partial(_deg2_kernel, acc_max=float(self.acc_max))
            call = pl.pallas_call(
                kernel,
                grid=grid,
                in_specs=[smem_spec, edge_spec, vec_spec, edge_spec],
                out_specs=(edge_spec, vec_spec, edge_spec),
                out_shape=(jax.ShapeDtypeStruct((d, prows, 128), dt),
                           jax.ShapeDtypeStruct((prows, 128), dt),
                           jax.ShapeDtypeStruct((d, prows, 128), dt)),
                input_output_aliases={3: 2},   # acc in -> acc out (same buffer)
                compiler_params=cparams,
            )

            def fwd(c2v, chn, seed, acc):
                c2v3 = jnp.asarray(c2v, dt).reshape(d, rows, 128)
                chn2 = jnp.asarray(chn, dt).reshape(rows, 128)
                if pad_rows:
                    c2v3 = jnp.pad(c2v3, ((0, 0), (0, pad_rows), (0, 0)))
                    chn2 = jnp.pad(chn2, ((0, pad_rows), (0, 0)))
                # torch.randint(0, 2**depth, (degree, 1)): one uniform integer
                # threshold per degree row, shared across all N (and all tiles).
                key = jax.random.PRNGKey(seed)
                thr = jax.random.randint(
                    key, (d,), 0, acc_max_1).astype(jnp.float32)
                v2c3, post2, acc_new = call(thr, c2v3, chn2, acc)
                return (v2c3[:, :rows].reshape(d, n_),
                        post2[:rows].reshape(n_),
                        acc_new)

            # donate acc so the pallas alias is a true in-place update at the
            # XLA level (no defensive copy of the (degree, N) counter state).
            self._fwd = jax.jit(fwd, donate_argnums=(3,))

    @property
    def acc(self):
        """Counter state in the torch-visible (degree, N) layout."""
        return self._acc[:, :self.rows, :].reshape(self.degree, self.n)

    def __call__(self, c2v, chn, seed=0):
        if self.degree == 1:
            return self._fwd(c2v, chn)
        v2c, post, acc_new = self._fwd(
            c2v, chn, jnp.asarray(seed, jnp.int32), self._acc)
        self._acc = acc_new                    # torch: self.acc.data = ...
        return v2c, post


if __name__ == "__main__":
    N = 1024                                   # 8 sublane-rows x 128 lanes
    key = jax.random.PRNGKey(0)
    k1, k2, k3, k4, k5 = jax.random.split(key, 5)
    f32 = jnp.float32

    chn = jax.random.bernoulli(k1, 0.5, (N,)).astype(jnp.bfloat16)
    chn_f = chn.astype(f32)

    # ---- degree = 1 -------------------------------------------------------
    c2v1 = jax.random.bernoulli(k2, 0.5, (1, N)).astype(jnp.bfloat16)
    llr1 = jax.random.randint(k3, (N,), 0, 128).astype(f32)
    vn1 = VariableNodeCNT(degree=1, depth=7, LLR=llr1, n=N)
    v2c_1, post_1 = vn1(c2v1, chn)
    jax.block_until_ready((v2c_1, post_1))

    c2v1_f = c2v1.astype(f32)
    ref_v2c1 = jnp.zeros_like(c2v1_f).at[0].set(chn_f)
    ref_post1 = (chn_f == c2v1_f[0]).astype(f32)
    assert jnp.array_equal(v2c_1.astype(f32), ref_v2c1)
    assert jnp.array_equal(post_1.astype(f32), ref_post1)

    # ---- degree = 2 (stochastic counter path) -----------------------------
    c2v2 = jax.random.bernoulli(k4, 0.5, (2, N)).astype(jnp.bfloat16)
    llr2 = jax.random.randint(k5, (N,), 0, 128).astype(f32)
    vn2 = VariableNodeCNT(degree=2, depth=7, LLR=llr2, n=N)
    seed = 42
    v2c_2, post_2 = vn2(c2v2, chn, seed=seed)
    jax.block_until_ready((v2c_2, post_2, vn2.acc))

    # pure-JAX f32 reference with the identical thresholds (bf16 is exact
    # for {0,1} and integers <= 256, so results must match bit-for-bit).
    thr = jax.random.randint(jax.random.PRNGKey(seed), (2,), 0, 128).astype(f32)
    c2v2_f = c2v2.astype(f32)
    acc0 = jnp.broadcast_to(llr2[None, :], (2, N))
    eq = jnp.stack([(chn_f == c2v2_f[1]), (chn_f == c2v2_f[0])]).astype(f32)
    regen = (acc0 > thr[:, None]).astype(f32)
    ref_v2c2 = eq * chn_f + (1.0 - eq) * regen
    ref_acc2 = jnp.clip(acc0 + eq * (chn_f * 2.0 - 1.0), 0.0, 127.0)
    ref_post2 = (ref_v2c2[0] == c2v2_f[0]).astype(f32)

    assert jnp.array_equal(v2c_2.astype(f32), ref_v2c2)
    assert jnp.array_equal(post_2.astype(f32), ref_post2)
    assert jnp.array_equal(vn2.acc.astype(f32), ref_acc2)

    print("KERNEL_OK")
</pallas_src>

<mosaic_0001>
module attributes {stable_mosaic.version = 11 : i64} {
  func.func @_deg1_kernel(%arg0: i32, %arg1: memref<1x8x128xbf16, #tpu.memory_space<vmem>>, %arg2: memref<8x128xbf16, #tpu.memory_space<vmem>>, %arg3: memref<1x8x128xbf16, #tpu.memory_space<vmem>>, %arg4: memref<8x128xbf16, #tpu.memory_space<vmem>>) attributes {dimension_semantics = [#tpu.dimension_semantics<parallel>], iteration_bounds = array<i64: 1>, scalar_prefetch = 0 : i64, scratch_operands = 0 : i64, tpu.core_type = #tpu.core_type<tc>, window_params = [{transform_indices = @transform_0, window_bounds = array<i64: 1, 8, 128>}, {transform_indices = @transform_1, window_bounds = array<i64: 8, 128>}, {transform_indices = @transform_2, window_bounds = array<i64: 1, 8, 128>}, {transform_indices = @transform_3, window_bounds = array<i64: 8, 128>}]} {
    %c0 = arith.constant 0 : index
    %c0_0 = arith.constant 0 : index
    %0 = vector.load %arg2[%c0, %c0_0] : memref<8x128xbf16, #tpu.memory_space<vmem>>, vector<8x128xbf16>
    %c0_1 = arith.constant 0 : index
    %c0_2 = arith.constant 0 : index
    %c0_3 = arith.constant 0 : index
    %1 = vector.load %arg3[%c0_1, %c0_2, %c0_3] : memref<1x8x128xbf16, #tpu.memory_space<vmem>>, vector<1x8x128xbf16>
    %2 = vector.shape_cast %1 : vector<1x8x128xbf16> to vector<8x128xbf16>
    %3 = vector.shape_cast %0 : vector<8x128xbf16> to vector<1x8x128xbf16>
    tpu.vector_store %arg3[%c0_1, %c0_2, %c0_3], %3 {strides = array<i32>} : memref<1x8x128xbf16, #tpu.memory_space<vmem>>, vector<1x8x128xbf16>,
    %c0_4 = arith.constant 0 : index
    %c0_5 = arith.constant 0 : index
    %c0_6 = arith.constant 0 : index
    %4 = vector.load %arg1[%c0_4, %c0_5, %c0_6] : memref<1x8x128xbf16, #tpu.memory_space<vmem>>, vector<1x8x128xbf16>
    %5 = vector.shape_cast %4 : vector<1x8x128xbf16> to vector<8x128xbf16>
    %6 = arith.cmpf oeq, %0, %5 : vector<8x128xbf16>
    %7 = arith.extui %6 : vector<8x128xi1> to vector<8x128xi32>
    %8 = arith.sitofp %7 : vector<8x128xi32> to vector<8x128xf32>
    %9 = arith.truncf %8 : vector<8x128xf32> to vector<8x128xbf16>
    %c0_7 = arith.constant 0 : index
    %c0_8 = arith.constant 0 : index
    %10 = vector.load %arg4[%c0_7, %c0_8] : memref<8x128xbf16, #tpu.memory_space<vmem>>, vector<8x128xbf16>
    tpu.vector_store %arg4[%c0_7, %c0_8], %9 {strides = array<i32>} : memref<8x128xbf16, #tpu.memory_space<vmem>>, vector<8x128xbf16>,
    return
  }
  func.func @transform_0(%arg0: i32) -> (i32, i32, i32) {
    %c0_i32 = arith.constant 0 : i32
    %c0_i32_0 = arith.constant 0 : i32
    %c0_i32_1 = arith.constant 0 : i32
    return %c0_i32, %arg0, %c0_i32_0 : i32, i32, i32
  }
  func.func @transform_1(%arg0: i32) -> (i32, i32) {
    %c0_i32 = arith.constant 0 : i32
    %c0_i32_0 = arith.constant 0 : i32
    return %arg0, %c0_i32 : i32, i32
  }
  func.func @transform_2(%arg0: i32) -> (i32, i32, i32) {
    %c0_i32 = arith.constant 0 : i32
    %c0_i32_0 = arith.constant 0 : i32
    %c0_i32_1 = arith.constant 0 : i32
    return %c0_i32, %arg0, %c0_i32_0 : i32, i32, i32
  }
  func.func @transform_3(%arg0: i32) -> (i32, i32) {
    %c0_i32 = arith.constant 0 : i32
    %c0_i32_0 = arith.constant 0 : i32
    return %arg0, %c0_i32 : i32, i32
  }
}

</mosaic_0001>

<llo_original>
// kernel: fwd.1
$region0: #{fwd.1}
  #allocation0 [shape = 'u32[]', space=smem, size = 0x4, offset = 0x4, fixed_abs, tag = 'smem constant byte address 0x4 - core index']
  #allocation1 [shape = 'u32[144,128]{1,0:T(1,128)}', space=vmem, size = 0x12000, scoped, tag = 'internal scratch']
  %s0 = inlined_call_operand.vmem [shape: bf16[1,8,128], index: 0, kind: input, shape index: {}]
  %s1 = inlined_call_operand.vmem [shape: bf16[8,128], index: 1, kind: input, shape index: {}]
  %s2 = inlined_call_operand.vmem [shape: bf16[1,8,128], index: 2, kind: output, shape index: {0}]
  %s3 = inlined_call_operand.hbm [shape: bf16[8,128], index: 3, kind: output, shape index: {1}]
  %4 = xla_tuple %s2, %s3
  %s5 = sld [smem:[#allocation0]]
  $region26: #{fwd.1} parent=0
    _
  %s7 = ssub.s32 1, %s5
  %s8 = scalar_select 0, %s7, %s5
  $region1: #{fwd.1} parent=0
    #allocation2 [shape = 'u8[2048]{0}', space=vmem, size = 0x800, scoped, tag = 'output window, operand 1, single buffered']
    #allocation3 [shape = 's32[1]{0}', space=sflag, size = 0x4, scoped, tag = 'scoped memory for fwd.1']
    %9 = vsyncpa [#allocation3], 0
    // Predicated region
    $region2: #{fwd.1} parent=1 // pred_check
      _
    $region3: #{fwd.1} parent=1 // pred_check_branch
      %11 = sbr.rel (0) target = $region5
    $region4: #{fwd.1} parent=1 // pred_region
      _
    $region5: #{fwd.1} parent=1 // pred_fallthru
      _
    // Predicated region
    $region6: #{fwd.1} parent=1 // pred_check
      _
    $region7: #{fwd.1} parent=1 // pred_check_branch
      %13 = sbr.rel (0) target = $region9
    $region8: #{fwd.1} parent=1 // pred_region
      _
    $region9: #{fwd.1} parent=1 // pred_fallthru
      _
    %v16 = vld [vmem:[%s1] sm:$0xf]
    %17 = vst [vmem:[%s2] sm:$0xf] %v16
    %v18 = vld [vmem:[%s0] sm:$0xf]
    %vm19 = vcmp.eq.bf16.partialorder %v16, %v18
    %v20 = vsel %vm19, 65537, 0
    %v21 = vunpack.c.l.b16 %v20
    %vm22 = vcmp.ne.s32.totalorder %v21, 0
    %v23 = vsel %vm22, 1, 0
    %v24 = vcvt.s32.f32 %v23
    %v25 = vpack.c.bf16 %v24, %v24
    %26 = vst [vmem:[#allocation2] sm:$0xf] %v25
    // Predicated region
    $region10: #{fwd.1} parent=1 // pred_check
      _
    $region11: #{fwd.1} parent=1 // pred_check_branch
      %28 = sbr.rel (0) target = $region13
    $region12: #{fwd.1} parent=1 // pred_region
      _
    $region13: #{fwd.1} parent=1 // pred_fallthru
      _
    // Predicated region
    $region14: #{fwd.1} parent=1 // pred_check
      _
    $region15: #{fwd.1} parent=1 // pred_check_branch
      %30 = sbr.rel (0) target = $region17
    $region16: #{fwd.1} parent=1 // pred_region
      %s32 = ssub.s32 64, 64
      %33 = vsyncadd [#allocation3], %s32
      %s35 = sshll.u32 [#allocation2], 4
      %s36 = int_to_ptr.vmem [resolvable:$true] %s35
      %38 = dma.vmem_to_hbm [thread:$0]  %s36, 64, %s3, [#allocation3]
    $region17: #{fwd.1} parent=1 // pred_fallthru
      _
    // Predicated region
    $region18: #{fwd.1} parent=1 // pred_check
      _
    $region19: #{fwd.1} parent=1 // pred_check_branch
      %40 = sbr.rel (0) target = $region21
    $region20: #{fwd.1} parent=1 // pred_region
      _
    $region21: #{fwd.1} parent=1 // pred_fallthru
      _
    // Predicated region
    $region22: #{fwd.1} parent=1 // pred_check
      _
    $region23: #{fwd.1} parent=1 // pred_check_branch
      %42 = sbr.rel (0) target = $region25
    $region24: #{fwd.1} parent=1 // pred_region
      %43 = dma.done [#allocation3], 64
    $region25: #{fwd.1} parent=1 // pred_fallthru
      _
    %44 = vsyncpa [#allocation3], 1

</llo_original>
